<compile_context>
chip_gen: v7x
topology: tpu7x:2x2x1
jax: 0.10.0
libtpu: 0.0.40
codegen_flags: <defaults>
</compile_context>

<pallas_src>
import functools

import numpy as np
import jax
import jax.numpy as jnp
from jax.experimental import pallas as pl
from jax.experimental.pallas import tpu as pltpu


# ----------------------------------------------------------------------------
# shared in-kernel helpers
# ----------------------------------------------------------------------------
def _ln(x, w, b, eps=1e-5):
    """torch.nn.LayerNorm over the last dim (computed in fp32)."""
    xf = x.astype(jnp.float32)
    mu = jnp.mean(xf, axis=-1, keepdims=True)
    d = xf - mu
    var = jnp.mean(d * d, axis=-1, keepdims=True)
    return d * jax.lax.rsqrt(var + eps) * w + b


def _temporal_conv_resid(x, w, b, pos, mask):
    """x: (rows, C). Returns x + depthwise k=3 temporal conv (zero pad) + b + pos.

    mask: (rows, 2) host-precomputed float masks; col 0 zeroes t==0 rows of the
    rolled-forward operand, col 1 zeroes t==T-1 rows of the rolled-back operand.
    """
    rows = x.shape[0]
    prev = pltpu.roll(x, shift=1, axis=0) * mask[:, 0:1]         # row r <- x[r-1]
    nxt = pltpu.roll(x, shift=rows - 1, axis=0) * mask[:, 1:2]   # row r <- x[r+1]
    return x + prev * w[0:1] + x * w[1:2] + nxt * w[2:3] + b + pos


# ----------------------------------------------------------------------------
# Kernel A (add_video_feat=False): last layer's frame_features only,
# tiled over batch with a "parallel" grid (blocks of nb*T rows).
#   frame_features = x + depthwise_temporal_conv(x) + pos
# ----------------------------------------------------------------------------
def _frame_kernel(T, x_ref, mask_ref, w_ref, b_ref, pos_ref, o_ref):
    x = x_ref[...]
    nb = x.shape[0] // T
    pos = jnp.tile(pos_ref[...], (nb, 1))            # (nb*T, C)
    o_ref[...] = _temporal_conv_resid(x, w_ref[...], b_ref[...], pos, mask_ref[...])


def _pick_batch_tile(N, T, target_rows=1024):
    """Largest divisor of N whose tile (nb*T rows) stays near the roofline sweet spot."""
    max_nb = max(1, target_rows // T)
    nb = 1
    for d in range(1, N + 1):
        if N % d == 0 and d <= max_nb:
            nb = d
    return nb


def frame_features_pallas(x2d, conv_w, conv_b, pos, conv_mask_tile, T, nb):
    NT, C = x2d.shape
    rows = nb * T
    return pl.pallas_call(
        functools.partial(_frame_kernel, T),
        out_shape=jax.ShapeDtypeStruct((NT, C), x2d.dtype),
        grid_spec=pltpu.PrefetchScalarGridSpec(
            num_scalar_prefetch=0,
            grid=(NT // rows,),
            in_specs=[
                pl.BlockSpec((rows, C), lambda i: (i, 0)),   # x tile
                pl.BlockSpec((rows, 2), lambda i: (0, 0)),   # conv boundary masks
                pl.BlockSpec((3, C), lambda i: (0, 0)),      # conv taps
                pl.BlockSpec((1, C), lambda i: (0, 0)),      # conv bias
                pl.BlockSpec((T, C), lambda i: (0, 0)),      # pos (un-tiled)
            ],
            out_specs=pl.BlockSpec((rows, C), lambda i: (i, 0)),
        ),
        compiler_params=pltpu.CompilerParams(
            dimension_semantics=("parallel",)),
    )(x2d, conv_mask_tile, conv_w, conv_b, pos)


# ----------------------------------------------------------------------------
# Kernel B (add_video_feat=True): fully fused
#   grid=(L,):  frame_features(layer l)  ->  decoder layer l (cls cross-attn + MLP)
#   cls state carried in VMEM scratch (f32); head (LN + proj) fused into last step.
# ----------------------------------------------------------------------------
# packed per-layer (1, C) vectors, rows of vecc[l]:
#   0..2 conv taps (w_{t-1}, w_t, w_{t+1}), 3 conv bias,
#   4 ln1w, 5 ln1b, 6 ln2w, 7 ln2b, 8 ln3w, 9 ln3b,
#   10 bq, 11 bk, 12 bv, 13 bo, 14 b2
def _evl_fused_kernel(T, H,
                      x_ref, mask_ref, pos_ref, vecc_ref, b1_ref,
                      wqkv_ref, wo_ref, w1_ref, w2_ref,
                      sel_ref, selt_ref, cls_ref,
                      headc_ref, pw_ref, pb_ref,
                      o_ref, xq_ref):
    l = pl.program_id(0)
    L = pl.num_programs(0)

    x = x_ref[...]                      # (N*T, C) f32
    NT, C = x.shape
    N = NT // T

    @pl.when(l == 0)
    def _():
        xq_ref[...] = cls_ref[...]      # init cls-token state, (N, C) f32

    vc = vecc_ref[0]                    # (15, C)

    # ---- frame features: x + depthwise temporal conv + pos embed ----
    pos = jnp.tile(pos_ref[0], (N, 1))                         # (NT, C)
    ff = _temporal_conv_resid(x, vc[0:3], vc[3:4], pos, mask_ref[...])

    # ---- cross-attention decoder layer (cls token attends over T frames) ----
    yn = _ln(ff, vc[8:9], vc[9:10])     # norm3(y)   (NT, C) f32
    xq = xq_ref[...]                    # (N, C)  f32
    xn = _ln(xq, vc[4:5], vc[5:6])      # norm1(x)   (N, C) f32

    # fused q/k/v projection: one (N+NT, C) x (C, 3C) bf16 MXU launch
    cat = jnp.concatenate([xn, yn], axis=0).astype(jnp.bfloat16)         # (N+NT, C)
    qkv = jnp.dot(cat, wqkv_ref[0], preferred_element_type=jnp.float32)  # (N+NT, 3C)
    q = qkv[:N, :C] + vc[10:11]                 # (N, C)    (discard cross-blocks)
    k = qkv[N:, C:2 * C] + vc[11:12]            # (NT, C)
    v = qkv[N:, 2 * C:] + vc[12:13]             # (NT, C)

    Chd = C // H
    scale = 1.0 / (Chd ** 0.5)

    # add_mask=False in the reference module -> mask == ones -> no masking needed.
    # Batched over N (no per-batch Python loop / concatenate):
    k3 = k.reshape(N, T, C)
    v3 = v.reshape(N, T, C)
    prod = (q * scale).reshape(N, 1, C) * k3                              # (N, T, C)
    aff = jnp.dot(prod.reshape(NT, C), sel_ref[...],
                  preferred_element_type=jnp.float32)                     # (NT, H)
    aff3 = aff.reshape(N, T, H)
    aff3 = aff3 - jnp.max(aff3, axis=1, keepdims=True)
    e = jnp.exp(aff3)
    p3 = e / jnp.sum(e, axis=1, keepdims=True)          # exact softmax normalization
    pf = jnp.dot(p3.reshape(NT, H), selt_ref[...],
                 preferred_element_type=jnp.float32)                      # (NT, C)
    mix = jnp.sum(pf.reshape(N, T, C) * v3, axis=1)                       # (N, C)

    xq = xq + jnp.dot(mix.astype(jnp.bfloat16), wo_ref[0],
                      preferred_element_type=jnp.float32) + vc[13:14]

    xn2 = _ln(xq, vc[6:7], vc[7:8])     # norm2
    h = jnp.dot(xn2.astype(jnp.bfloat16), w1_ref[0],
                preferred_element_type=jnp.float32) + b1_ref[0]
    h = h * jax.nn.sigmoid(1.702 * h)   # QuickGELU (f32)
    # TODO(synk): nn.Dropout(p=0.5) modeled as identity (eval mode only).
    xq = xq + jnp.dot(h.astype(jnp.bfloat16), w2_ref[0],
                      preferred_element_type=jnp.float32) + vc[14:15]
    xq_ref[...] = xq

    # ---- final LayerNorm + projection head, fused into the last layer ----
    @pl.when(l == L - 1)
    def _():
        hc = headc_ref[...]             # (2, C): [norm_w; norm_b]
        xn3 = _ln(xq, hc[0:1], hc[1:2])
        o_ref[...] = (jnp.dot(xn3, pw_ref[...], preferred_element_type=jnp.float32)
                      + pb_ref[...]).astype(o_ref.dtype)


# ----------------------------------------------------------------------------
# Full EVLTransformer forward (Pallas)
# ----------------------------------------------------------------------------
def _conv_boundary_mask(rows, T):
    t = np.arange(rows) % T
    return jnp.asarray(np.stack([(t != 0), (t != T - 1)], axis=1).astype(np.float32))


def evl_forward_pallas(params, x, video_mask, *, num_heads, add_video_feat,
                       single_buffer_mlp=False):
    del video_mask  # add_mask=False (default) -> mask replaced by ones -> no-op
    N, T, C = x.shape
    L = params['conv_w'].shape[0]
    NT = N * T

    x2d = x.reshape(NT, C)

    if not add_video_feat:
        # Only the last layer's frame_features survive the PyTorch loop
        # (frame_features is recomputed from in_features every iteration),
        # so layers 0..L-2 are dead compute on this path.
        nb = _pick_batch_tile(N, T)
        ff = frame_features_pallas(x2d, params['conv_w'][L - 1],
                                   params['conv_b'][L - 1], params['pos'][L - 1],
                                   _conv_boundary_mask(nb * T, T), T, nb)
        return ff.reshape(N, T, C)

    H = num_heads
    Chd = C // H
    layers = params['layers']
    M = layers[0]['w1'].shape[1]
    O = params['proj_w'].shape[1]

    # ---- host-side packing (constant-folds / hoists under jit) ----
    vecc = jnp.stack([
        jnp.concatenate([params['conv_w'][i], params['conv_b'][i],
                         lw['ln1w'], lw['ln1b'], lw['ln2w'], lw['ln2b'],
                         lw['ln3w'], lw['ln3b'],
                         lw['bq'], lw['bk'], lw['bv'], lw['bo'],
                         lw['b2']], axis=0)
        for i, lw in enumerate(layers)])                    # (L, 15, C) f32
    b1_s = jnp.stack([lw['b1'] for lw in layers])           # (L, 1, M) f32

    # big per-layer matmul weights -> bf16 (halves weight streaming + VMEM)
    wqkv_s = jnp.stack([jnp.concatenate([lw['wq'], lw['wk'], lw['wv']], axis=1)
                        for lw in layers]).astype(jnp.bfloat16)   # (L, C, 3C)
    wo_s = jnp.stack([lw['wo'] for lw in layers]).astype(jnp.bfloat16)   # (L, C, C)
    w1_s = jnp.stack([lw['w1'] for lw in layers]).astype(jnp.bfloat16)   # (L, C, M)
    w2_s = jnp.stack([lw['w2'] for lw in layers]).astype(jnp.bfloat16)   # (L, M, C)

    # block-diagonal head selector matrices (precomputed, constant across layers)
    sel = jnp.asarray(
        (np.arange(C)[:, None] // Chd == np.arange(H)[None, :]).astype(np.float32))
    sel_t = sel.T                                           # (H, C)

    cls_tiled = jnp.tile(params['cls_token'].reshape(1, C), (N, 1))          # (N, C)
    headc = jnp.concatenate([params['norm_w'], params['norm_b']], axis=0)    # (2, C)
    conv_mask = _conv_boundary_mask(NT, T)                                   # (NT, 2)

    const2 = lambda l: (0, 0)
    perlayer3 = lambda l: (l, 0, 0)

    # ---- explicit VMEM budget (bf16 per-layer weight block, double-buffered) ----
    w_bytes = 2 * (C * 3 * C + C * C + C * M + M * C)
    misc_bytes = 4 * (NT * C + NT * 2 + T * C + 15 * C + M + C * H + H * C
                      + 2 * N * C + 2 * C + C * O + O + N * O)
    vmem_limit = int(min(max(2 * (w_bytes + misc_bytes) + (4 << 20), 32 << 20),
                         96 << 20))

    # On v7x (64 MiB VMEM) at production sizes, drop the byte-dominant MLP weights
    # to single buffering instead of blowing the VMEM budget.
    if single_buffer_mlp:
        w1_spec = pl.BlockSpec((1, C, M), perlayer3, pipeline_mode=pl.Buffered(1))
        w2_spec = pl.BlockSpec((1, M, C), perlayer3, pipeline_mode=pl.Buffered(1))
    else:
        w1_spec = pl.BlockSpec((1, C, M), perlayer3)
        w2_spec = pl.BlockSpec((1, M, C), perlayer3)

    out = pl.pallas_call(
        functools.partial(_evl_fused_kernel, T, H),
        out_shape=jax.ShapeDtypeStruct((N, O), x.dtype),
        grid_spec=pltpu.PrefetchScalarGridSpec(
            num_scalar_prefetch=0,
            grid=(L,),
            in_specs=[
                pl.BlockSpec((NT, C), const2),               # x2d (constant)
                pl.BlockSpec((NT, 2), const2),               # conv boundary masks
                pl.BlockSpec((1, T, C), perlayer3),          # pos (un-tiled over N)
                pl.BlockSpec((1, 15, C), perlayer3),         # packed (1,C) vectors
                pl.BlockSpec((1, 1, M), perlayer3),          # b1
                pl.BlockSpec((1, C, 3 * C), perlayer3),      # wq || wk || wv (bf16)
                pl.BlockSpec((1, C, C), perlayer3),          # wo (bf16)
                w1_spec,                                     # w1 (bf16)
                w2_spec,                                     # w2 (bf16)
                pl.BlockSpec((C, H), const2),                # sel
                pl.BlockSpec((H, C), const2),                # sel_t
                pl.BlockSpec((N, C), const2),                # cls token (tiled)
                pl.BlockSpec((2, C), const2),                # head norm w/b
                pl.BlockSpec((C, O), const2),                # proj_w
                pl.BlockSpec((1, O), const2),                # proj_b
            ],
            out_specs=pl.BlockSpec((N, O), const2),
            scratch_shapes=[pltpu.VMEM((N, C), jnp.float32)],   # carried cls state
        ),
        compiler_params=pltpu.CompilerParams(
            dimension_semantics=("arbitrary",),
            vmem_limit_bytes=vmem_limit),
    )(x2d, conv_mask, params['pos'], vecc, b1_s, wqkv_s, wo_s, w1_s, w2_s,
      sel, sel_t, cls_tiled, headc, params['proj_w'], params['proj_b'])

    return out.reshape(N, 1, O)


# ----------------------------------------------------------------------------
# Deterministic parameter construction (shapes follow the PyTorch __init__)
# ----------------------------------------------------------------------------
def init_params(key, *, num_layers, num_frames, feat_dim, mlp_factor, output_dim):
    L, T, C = num_layers, num_frames, feat_dim
    M = int(round(mlp_factor * C))
    keys = iter(jax.random.split(key, 128))

    def nrm(shape, scale):
        return scale * jax.random.normal(next(keys), shape, jnp.float32)

    params = dict(
        conv_w=nrm((L, 3, C), 0.3),          # depthwise Conv1d weight (torch: (C,1,3))
        conv_b=nrm((L, 1, C), 0.02),
        pos=nrm((L, T, C), 0.02),            # temporal_pos_embed
        cls_token=nrm((C,), 0.02),
        norm_w=1.0 + nrm((1, C), 0.02),
        norm_b=nrm((1, C), 0.02),
        proj_w=nrm((C, output_dim), 1.0 / np.sqrt(C)),
        proj_b=nrm((1, output_dim), 0.02),
        layers=[],
    )
    for _ in range(L):
        lw = dict(
            ln1w=1.0 + nrm((1, C), 0.02), ln1b=nrm((1, C), 0.02),
            ln2w=1.0 + nrm((1, C), 0.02), ln2b=nrm((1, C), 0.02),
            ln3w=1.0 + nrm((1, C), 0.02), ln3b=nrm((1, C), 0.02),
            wq=nrm((C, C), 1.0 / np.sqrt(C)), bq=jnp.zeros((1, C), jnp.float32),
            wk=nrm((C, C), 1.0 / np.sqrt(C)), bk=jnp.zeros((1, C), jnp.float32),
            wv=nrm((C, C), 1.0 / np.sqrt(C)), bv=jnp.zeros((1, C), jnp.float32),
            wo=nrm((C, C), 1.0 / np.sqrt(C)), bo=jnp.zeros((1, C), jnp.float32),
            w1=nrm((C, M), 1.0 / np.sqrt(C)), b1=nrm((1, M), 1e-6),
            w2=nrm((M, C), 1.0 / np.sqrt(M)), b2=nrm((1, C), 1e-6),
        )
        params['layers'].append(lw)
    return params


# ----------------------------------------------------------------------------
# Pure-JAX reference (mirrors the PyTorch forward, full per-layer loop).
# ----------------------------------------------------------------------------
_HP = jax.lax.Precision.HIGHEST


def _ref_ln(z, w, b, eps=1e-5):
    mu = jnp.mean(z, axis=-1, keepdims=True)
    d = z - mu
    var = jnp.mean(d * d, axis=-1, keepdims=True)
    return d * jax.lax.rsqrt(var + eps) * w + b


def _ref_decoder_layer(xq, y, lw, H):
    yn = _ref_ln(y, lw['ln3w'], lw['ln3b'])
    xn = _ref_ln(xq, lw['ln1w'], lw['ln1b'])
    q = jnp.matmul(xn, lw['wq'], precision=_HP) + lw['bq']
    k = jnp.matmul(yn, lw['wk'], precision=_HP) + lw['bk']
    v = jnp.matmul(yn, lw['wv'], precision=_HP) + lw['bv']
    N, Lq, C = q.shape
    T = k.shape[1]
    Chd = C // H
    qh = q.reshape(N, Lq, H, Chd)
    kh = k.reshape(N, T, H, Chd)
    vh = v.reshape(N, T, H, Chd)
    aff = jnp.einsum('nqhc,nkhc->nqkh', qh / Chd ** 0.5, kh, precision=_HP)
    aff = jax.nn.softmax(aff, axis=-2)
    mix = jnp.einsum('nqlh,nlhc->nqhc', aff, vh, precision=_HP).reshape(N, Lq, C)
    xq = xq + jnp.matmul(mix, lw['wo'], precision=_HP) + lw['bo']
    xn2 = _ref_ln(xq, lw['ln2w'], lw['ln2b'])
    h1 = jnp.matmul(xn2, lw['w1'], precision=_HP) + lw['b1']
    h1 = h1 * jax.nn.sigmoid(1.702 * h1)
    xq = xq + jnp.matmul(h1, lw['w2'], precision=_HP) + lw['b2']
    return xq


def ref_forward(params, x, video_mask, *, num_heads, add_video_feat):
    del video_mask
    N, T, C = x.shape
    L = params['conv_w'].shape[0]
    if add_video_feat:
        xq = jnp.tile(params['cls_token'].reshape(1, 1, C), (N, 1, 1))
    out = x
    for i in range(L):
        w = params['conv_w'][i]
        b = params['conv_b'][i]
        xp = jnp.pad(x, ((0, 0), (1, 1), (0, 0)))
        feat = xp[:, :-2] * w[0] + xp[:, 1:-1] * w[1] + xp[:, 2:] * w[2] + b
        ff = x + feat + params['pos'][i][None]
        if add_video_feat:
            xq = _ref_decoder_layer(xq, ff, params['layers'][i], num_heads)
        out = ff
    if add_video_feat:
        xn = _ref_ln(xq, params['norm_w'], params['norm_b'])
        return jnp.matmul(xn, params['proj_w'], precision=_HP) + params['proj_b']
    return out


# ----------------------------------------------------------------------------
if __name__ == "__main__":
    key = jax.random.PRNGKey(0)
    N, T, C, H = 2, 8, 128, 16          # batch, num_frames, backbone_feature_dim, heads
    L = 2                               # decoder_num_layers
    OUT_DIM = 256                       # output_dim for the add_video_feat head

    kx, kp = jax.random.split(key, 2)
    x = jax.random.normal(kx, (N, T, C), jnp.float32)
    video_mask = jnp.ones((N, T), jnp.float32)  # unused: add_mask=False -> no-op

    params = init_params(kp, num_layers=L, num_frames=T, feat_dim=C,
                         mlp_factor=4.0, output_dim=OUT_DIM)

    # --- default configuration: add_video_feat=False -> output (N, T, C) ---
    out_frames = evl_forward_pallas(params, x, video_mask,
                                    num_heads=H, add_video_feat=False)
    out_frames = jax.block_until_ready(out_frames)
    ref_frames = ref_forward(params, x, video_mask,
                             num_heads=H, add_video_feat=False)
    np.testing.assert_allclose(np.asarray(out_frames), np.asarray(ref_frames),
                               rtol=1e-5, atol=1e-5)

    # --- add_video_feat=True configuration -> output (N, 1, OUT_DIM) ---
    # bf16 weights / MXU operands (f32 accumulation) vs. HIGHEST-precision f32 ref.
    out_vid = evl_forward_pallas(params, x, video_mask,
                                 num_heads=H, add_video_feat=True)
    out_vid = jax.block_until_ready(out_vid)
    ref_vid = ref_forward(params, x, video_mask,
                          num_heads=H, add_video_feat=True)
    np.testing.assert_allclose(np.asarray(out_vid), np.asarray(ref_vid),
                               rtol=2e-2, atol=2e-2)

    print("KERNEL_OK")
</pallas_src>

<mosaic_0001>
module attributes {stable_mosaic.version = 11 : i64} {
  func.func @_frame_kernel(%arg0: i32, %arg1: memref<16x128xf32, #tpu.memory_space<vmem>>, %arg2: memref<16x2xf32, #tpu.memory_space<vmem>>, %arg3: memref<3x128xf32, #tpu.memory_space<vmem>>, %arg4: memref<1x128xf32, #tpu.memory_space<vmem>>, %arg5: memref<8x128xf32, #tpu.memory_space<vmem>>, %arg6: memref<16x128xf32, #tpu.memory_space<vmem>>) attributes {dimension_semantics = [#tpu.dimension_semantics<parallel>], iteration_bounds = array<i64: 1>, scalar_prefetch = 0 : i64, scratch_operands = 0 : i64, tpu.core_type = #tpu.core_type<tc>, window_params = [{transform_indices = @transform_0, window_bounds = array<i64: 16, 128>}, {pipeline_mode = #tpu.pipeline_mode<synchronous>, transform_indices = @transform_1, window_bounds = array<i64: 16, 2>}, {pipeline_mode = #tpu.pipeline_mode<synchronous>, transform_indices = @transform_2, window_bounds = array<i64: 3, 128>}, {pipeline_mode = #tpu.pipeline_mode<synchronous>, transform_indices = @transform_3, window_bounds = array<i64: 1, 128>}, {pipeline_mode = #tpu.pipeline_mode<synchronous>, transform_indices = @transform_4, window_bounds = array<i64: 8, 128>}, {transform_indices = @transform_5, window_bounds = array<i64: 16, 128>}]} {
    %c0 = arith.constant 0 : index
    %c0_0 = arith.constant 0 : index
    %0 = vector.load %arg1[%c0, %c0_0] : memref<16x128xf32, #tpu.memory_space<vmem>>, vector<16x128xf32>
    %c0_1 = arith.constant 0 : index
    %c0_2 = arith.constant 0 : index
    %1 = vector.load %arg5[%c0_1, %c0_2] : memref<8x128xf32, #tpu.memory_space<vmem>>, vector<8x128xf32>
    %2 = tpu.concatenate %1, %1 in 0 : vector<8x128xf32>, vector<8x128xf32> -> vector<16x128xf32>
    %c0_3 = arith.constant 0 : index
    %c0_4 = arith.constant 0 : index
    %3 = vector.load %arg3[%c0_3, %c0_4] : memref<3x128xf32, #tpu.memory_space<vmem>>, vector<3x128xf32>
    %c0_5 = arith.constant 0 : index
    %c0_6 = arith.constant 0 : index
    %4 = vector.load %arg4[%c0_5, %c0_6] : memref<1x128xf32, #tpu.memory_space<vmem>>, vector<1x128xf32>
    %c0_7 = arith.constant 0 : index
    %c0_8 = arith.constant 0 : index
    %5 = vector.load %arg2[%c0_7, %c0_8] : memref<16x2xf32, #tpu.memory_space<vmem>>, vector<16x2xf32>
    %c1_i32 = arith.constant 1 : i32
    %6 = tpu.dynamic_rotate %0 by %c1_i32 dim 0 : vector<16x128xf32>, i32 -> vector<16x128xf32>
    %7 = vector.extract_strided_slice %5 {offsets = [0, 0], sizes = [16, 1], strides = [1, 1]} : vector<16x2xf32> to vector<16x1xf32>
    %8 = vector.broadcast %7 : vector<16x1xf32> to vector<16x128xf32>
    %9 = arith.mulf %6, %8 : vector<16x128xf32>
    %c15_i32 = arith.constant 15 : i32
    %10 = tpu.dynamic_rotate %0 by %c15_i32 dim 0 : vector<16x128xf32>, i32 -> vector<16x128xf32>
    %11 = vector.extract_strided_slice %5 {offsets = [0, 1], sizes = [16, 1], strides = [1, 1]} : vector<16x2xf32> to vector<16x1xf32>
    %12 = vector.broadcast %11 : vector<16x1xf32> to vector<16x128xf32>
    %13 = arith.mulf %10, %12 : vector<16x128xf32>
    %14 = vector.extract_strided_slice %3 {offsets = [0, 0], sizes = [1, 128], strides = [1, 1]} : vector<3x128xf32> to vector<1x128xf32>
    %15 = vector.broadcast %14 : vector<1x128xf32> to vector<16x128xf32>
    %16 = arith.mulf %9, %15 : vector<16x128xf32>
    %17 = arith.addf %0, %16 : vector<16x128xf32>
    %18 = vector.extract_strided_slice %3 {offsets = [1, 0], sizes = [1, 128], strides = [1, 1]} : vector<3x128xf32> to vector<1x128xf32>
    %19 = vector.broadcast %18 : vector<1x128xf32> to vector<16x128xf32>
    %20 = arith.mulf %0, %19 : vector<16x128xf32>
    %21 = arith.addf %17, %20 : vector<16x128xf32>
    %22 = vector.extract_strided_slice %3 {offsets = [2, 0], sizes = [1, 128], strides = [1, 1]} : vector<3x128xf32> to vector<1x128xf32>
    %23 = vector.broadcast %22 : vector<1x128xf32> to vector<16x128xf32>
    %24 = arith.mulf %13, %23 : vector<16x128xf32>
    %25 = arith.addf %21, %24 : vector<16x128xf32>
    %26 = vector.broadcast %4 : vector<1x128xf32> to vector<16x128xf32>
    %27 = arith.addf %25, %26 : vector<16x128xf32>
    %28 = arith.addf %27, %2 : vector<16x128xf32>
    %c0_9 = arith.constant 0 : index
    %c0_10 = arith.constant 0 : index
    %29 = vector.load %arg6[%c0_9, %c0_10] : memref<16x128xf32, #tpu.memory_space<vmem>>, vector<16x128xf32>
    tpu.vector_store %arg6[%c0_9, %c0_10], %28 {strides = array<i32>} : memref<16x128xf32, #tpu.memory_space<vmem>>, vector<16x128xf32>,
    return
  }
  func.func @transform_0(%arg0: i32) -> (i32, i32) {
    %c0_i32 = arith.constant 0 : i32
    %c0_i32_0 = arith.constant 0 : i32
    return %arg0, %c0_i32 : i32, i32
  }
  func.func @transform_1(%arg0: i32) -> (i32, i32) {
    %c0_i32 = arith.constant 0 : i32
    %c0_i32_0 = arith.constant 0 : i32
    %c0_i32_1 = arith.constant 0 : i32
    return %c0_i32, %c0_i32_0 : i32, i32
  }
  func.func @transform_2(%arg0: i32) -> (i32, i32) {
    %c0_i32 = arith.constant 0 : i32
    %c0_i32_0 = arith.constant 0 : i32
    %c0_i32_1 = arith.constant 0 : i32
    return %c0_i32, %c0_i32_0 : i32, i32
  }
  func.func @transform_3(%arg0: i32) -> (i32, i32) {
    %c0_i32 = arith.constant 0 : i32
    %c0_i32_0 = arith.constant 0 : i32
    %c0_i32_1 = arith.constant 0 : i32
    return %c0_i32, %c0_i32_0 : i32, i32
  }
  func.func @transform_4(%arg0: i32) -> (i32, i32) {
    %c0_i32 = arith.constant 0 : i32
    %c0_i32_0 = arith.constant 0 : i32
    %c0_i32_1 = arith.constant 0 : i32
    return %c0_i32, %c0_i32_0 : i32, i32
  }
  func.func @transform_5(%arg0: i32) -> (i32, i32) {
    %c0_i32 = arith.constant 0 : i32
    %c0_i32_0 = arith.constant 0 : i32
    return %arg0, %c0_i32 : i32, i32
  }
}

</mosaic_0001>

<llo_original>
// kernel: tpu_custom_call.1
$region0: #{tpu_custom_call.1}
  #allocation0 [shape = 'u32[]', space=smem, size = 0x4, offset = 0x4, fixed_abs, tag = 'smem constant byte address 0x4 - core index']
  #allocation1 [shape = 'u32[144,128]{1,0:T(1,128)}', space=vmem, size = 0x12000, scoped, tag = 'internal scratch']
  %s0 = inlined_call_operand.vmem [shape: f32[16,128], index: 0, kind: input, shape index: {}]
  %s1 = inlined_call_operand.vmem [shape: f32[16,2], index: 1, kind: input, shape index: {}]
  %s2 = inlined_call_operand.hbm [shape: f32[3,128], index: 2, kind: input, shape index: {}]
  %s3 = inlined_call_operand.vmem [shape: f32[1,128], index: 3, kind: input, shape index: {}]
  %s4 = inlined_call_operand.vmem [shape: f32[8,128], index: 4, kind: input, shape index: {}]
  %s5 = inlined_call_operand.hbm [shape: f32[16,128], index: 5, kind: output, shape index: {}]
  %s6 = sld [smem:[#allocation0]]
  $region34: #{tpu_custom_call.1} parent=0
    _
  %s8 = ssub.s32 1, %s6
  %s9 = scalar_select 0, %s8, %s6
  $region1: #{tpu_custom_call.1} parent=0
    #allocation2 [shape = 'u8[2048]{0}', space=vmem, size = 0x800, scoped, tag = 'input window, operand 2, single buffered']
    #allocation3 [shape = 's32[1]{0}', space=sflag, size = 0x4, scoped, tag = 'scoped memory for tpu_custom_call.1']
    #allocation4 [shape = 's32[1]{0}', space=sflag, size = 0x4, scoped, tag = 'scoped memory for tpu_custom_call.1']
    #allocation5 [shape = 'u8[8192]{0}', space=vmem, size = 0x2000, scoped, tag = 'output window, operand 0, single buffered']
    %10 = vsyncpa [#allocation3], 0
    %11 = vsyncpa [#allocation4], 0
    // Predicated region
    $region2: #{tpu_custom_call.1} parent=1 // pred_check
      _
    $region3: #{tpu_custom_call.1} parent=1 // pred_check_branch
      %13 = sbr.rel (0) target = $region5
    $region4: #{tpu_custom_call.1} parent=1 // pred_region
      _
    $region5: #{tpu_custom_call.1} parent=1 // pred_fallthru
      _
    // Predicated region
    $region6: #{tpu_custom_call.1} parent=1 // pred_check
      _
    $region7: #{tpu_custom_call.1} parent=1 // pred_check_branch
      %15 = sbr.rel (0) target = $region9
    $region8: #{tpu_custom_call.1} parent=1 // pred_region
      _
    $region9: #{tpu_custom_call.1} parent=1 // pred_fallthru
      _
    // Predicated region
    $region10: #{tpu_custom_call.1} parent=1 // pred_check
      _
    $region11: #{tpu_custom_call.1} parent=1 // pred_check_branch
      %17 = sbr.rel (0) target = $region13
    $region12: #{tpu_custom_call.1} parent=1 // pred_region
      %s19 = ssub.s32 64, 64
      %20 = vsyncadd [#allocation3], %s19
      %s22 = sshll.u32 [#allocation2], 4
      %s23 = int_to_ptr.vmem [resolvable:$true] %s22
      %25 = dma.hbm_to_vmem [thread:$0]  %s2, 64, %s23, [#allocation3]
    $region13: #{tpu_custom_call.1} parent=1 // pred_fallthru
      _
    // Predicated region
    $region14: #{tpu_custom_call.1} parent=1 // pred_check
      _
    $region15: #{tpu_custom_call.1} parent=1 // pred_check_branch
      %27 = sbr.rel (0) target = $region17
    $region16: #{tpu_custom_call.1} parent=1 // pred_region
      _
    $region17: #{tpu_custom_call.1} parent=1 // pred_fallthru
      _
    // Predicated region
    $region18: #{tpu_custom_call.1} parent=1 // pred_check
      _
    $region19: #{tpu_custom_call.1} parent=1 // pred_check_branch
      %29 = sbr.rel (0) target = $region21
    $region20: #{tpu_custom_call.1} parent=1 // pred_region
      _
    $region21: #{tpu_custom_call.1} parent=1 // pred_fallthru
      _
    // Predicated region
    $region22: #{tpu_custom_call.1} parent=1 // pred_check
      _
    $region23: #{tpu_custom_call.1} parent=1 // pred_check_branch
      %31 = sbr.rel (0) target = $region25
    $region24: #{tpu_custom_call.1} parent=1 // pred_region
      %32 = dma.done [#allocation3], 64
    $region25: #{tpu_custom_call.1} parent=1 // pred_fallthru
      _
    %v33 = vld [vmem:[%s0] sm:$0xff]
    %v34 = vld [vmem:[%s0 + $0x8] sm:$0xff]
    %v35 = vld [vmem:[%s4] sm:$0xff]
    %v36 = vld [vmem:[#allocation2] sm:$0x7]
    %v37 = vld [vmem:[%s3] sm:$0x1]
    %v38 = vld [vmem:[%s1] sm:$0xff]
    %v39 = vld [vmem:[%s1 + $0x8] sm:$0xff]
    %v40 = vrot.slane %v33, 7
    %v41 = vrot.slane %v34, 7
    %v42 = vlaneseq
    %v43 = vshrl.u32 %v42, 7
    %vm44 = vcmp.lt.s32.totalorder %v43, 1
    %v45 = vsel %vm44, %v40, %v41
    %v46 = vsel %vm44, %v41, %v40
    %48 = vset.pattern.permute.xlu0 0
    %49 = vperm.xlu0 %48, %v38
    %v50 = vpop.permute.xlu0 %49
    %53 = vset.pattern.permute.xlu0 0
    %54 = vperm.xlu0 %53, %v39
    %v55 = vpop.permute.xlu0 %54
    %v57 = vmul.f32 %v46, %v50
    %v58 = vmul.f32 %v45, %v55
    %v59 = vrot.slane %v33, 1
    %v60 = vrot.slane %v34, 1
    %vm61 = vcmp.lt.s32.totalorder %v43, 7
    %v62 = vsel %vm61, %v59, %v60
    %v63 = vsel %vm61, %v60, %v59
    %64 = vset.pattern.permute.xlu0 1
    %65 = vperm.xlu0 %64, %v38
    %v66 = vpop.permute.xlu0 %65
    %68 = vset.pattern.permute.xlu0 1
    %69 = vperm.xlu0 %68, %v39
    %v70 = vpop.permute.xlu0 %69
    %v72 = vmul.f32 %v62, %v66
    %v73 = vmul.f32 %v63, %v70
    %v74 = vlaneseq
    %v75 = vshrl.u32 %v74, 7
    %v76 = vsub.s32 0, %v75
    %v77 = vrot.slane %v36, %v76
    %v78 = vmul.f32 %v57, %v77
    %v79 = vmul.f32 %v58, %v77
    %v80 = vadd.f32 %v33, %v78
    %v81 = vadd.f32 %v34, %v79
    %v82 = vlaneseq
    %v83 = vshrl.u32 %v82, 7
    %v84 = vsub.s32 1, %v83
    %v85 = vrot.slane %v36, %v84
    %v86 = vmul.f32 %v33, %v85
    %v87 = vmul.f32 %v34, %v85
    %v88 = vadd.f32 %v80, %v86
    %v89 = vadd.f32 %v81, %v87
    %v90 = vlaneseq
    %v91 = vshrl.u32 %v90, 7
    %v92 = vsub.s32 2, %v91
    %v93 = vrot.slane %v36, %v92
    %v94 = vmul.f32 %v72, %v93
    %v95 = vmul.f32 %v73, %v93
    %v96 = vadd.f32 %v88, %v94
    %v97 = vadd.f32 %v89, %v95
    %v99 = vlaneseq
    %v100 = vshrl.u32 %v99, 7
    %v101 = vsub.s32 0, %v100
    %v102 = vrot.slane %v37, %v101
    %v104 = vadd.f32 %v96, %v102
    %v105 = vadd.f32 %v97, %v102
    %v106 = vadd.f32 %v104, %v35
    %v107 = vadd.f32 %v105, %v35
    %108 = vst [vmem:[#allocation5] sm:$0xff] %v106
    %109 = vst [vmem:[#allocation5 + $0x8] sm:$0xff] %v107
    // Predicated region
    $region26: #{tpu_custom_call.1} parent=1 // pred_check
      _
    $region27: #{tpu_custom_call.1} parent=1 // pred_check_branch
      %111 = sbr.rel (0) target = $region29
    $region28: #{tpu_custom_call.1} parent=1 // pred_region
      %s113 = ssub.s32 256, 256
      %114 = vsyncadd [#allocation4], %s113
      %s115 = sshll.u32 [#allocation5], 4
      %s116 = int_to_ptr.vmem [resolvable:$true] %s115
      %121 = dma.vmem_to_hbm [thread:$0]  %s116, 256, %s5, [#allocation4], 128, 128, 8
    $region29: #{tpu_custom_call.1} parent=1 // pred_fallthru
      _
    // Predicated region
    $region30: #{tpu_custom_call.1} parent=1 // pred_check
      _
    $region31: #{tpu_custom_call.1} parent=1 // pred_check_branch
      %123 = sbr.rel (0) target = $region33
    $region32: #{tpu_custom_call.1} parent=1 // pred_region
      %124 = dma.done [#allocation4], 256
    $region33: #{tpu_custom_call.1} parent=1 // pred_fallthru
      _
    %125 = vsyncpa [#allocation3], 1
    %126 = vsyncpa [#allocation4], 1

</llo_original>
